<compile_context>
chip_gen: v7x
topology: tpu7x:2x2x1
jax: 0.10.0
libtpu: 0.0.40
codegen_flags: <defaults>
</compile_context>

<pallas_src>
import jax
import jax.numpy as jnp
from jax.experimental import pallas as pl
from jax.experimental.pallas import tpu as pltpu


def _round_up(x, m):
    return (x + m - 1) // m * m


# ----------------------------- kernels -------------------------------------


def _resident_w_kernel(x_ref, wt_ref, b_ref, o_ref):
    # x_ref: (tm, d), wt_ref: (d, d) == W.T (constant block index -> DMA'd once),
    # b_ref: (1, d), o_ref: (tm, d)
    acc = jnp.dot(x_ref[...], wt_ref[...], preferred_element_type=jnp.float32)
    o_ref[...] = (acc + b_ref[...].astype(jnp.float32)).astype(o_ref.dtype)


def _tiled_kernel_f32out(x_ref, wt_ref, b_ref, o_ref):
    # float32 output: accumulate directly into the resident output block
    # (no scratch), bias folded into the k == 0 init.
    k = pl.program_id(2)

    @pl.when(k == 0)
    def _init():
        o_ref[...] = jnp.broadcast_to(b_ref[...], o_ref.shape)

    o_ref[...] += jnp.dot(x_ref[...], wt_ref[...], preferred_element_type=jnp.float32)


def _tiled_kernel_acc(x_ref, wt_ref, b_ref, o_ref, acc_ref):
    # low-precision output: f32 VMEM accumulator, single cast/store at last k.
    k = pl.program_id(2)

    @pl.when(k == 0)
    def _init():
        acc_ref[...] = jnp.broadcast_to(
            b_ref[...].astype(jnp.float32), acc_ref.shape
        )

    acc_ref[...] += jnp.dot(x_ref[...], wt_ref[...], preferred_element_type=jnp.float32)

    @pl.when(k == pl.num_programs(2) - 1)
    def _fin():
        o_ref[...] = acc_ref[...].astype(o_ref.dtype)


# ----------------------------- wrapper --------------------------------------


def _pick_feature_tile(d, pref):
    """Tile for a d_model axis: 256-aligned candidates preferred (v6e/v7x
    256x256 MXU), 128 acceptable (v5e).  Falls back to the full dim for small
    / unaligned d_model (legal full-extent BlockSpec)."""
    if d % 128 != 0:
        # TODO(synk): for large d_model not a multiple of 128, pad d_model to a
        # 128 multiple instead of using a full-dim W block (VMEM hazard).
        return d
    for t in (pref, 512, 256, 128):
        if t <= d and d % t == 0:
            return t
    return d


def hidden_linear(x, W, b, *, tm=512, tn_pref=1024, tk_pref=512, force_tiled=False):
    """Pallas HiddenLinear forward.

    x: [batch, pos, d_model], W: [d_model, d_model], b: [d_model]
    returns: [batch, pos, d_model] == x @ W.T + b
    """
    batch, pos, d = x.shape
    M = batch * pos
    out_dtype = x.dtype

    x2 = x.reshape(M, d)          # free reshape (collapse leading dims)
    Wt = W.T                      # one-time transpose: kernel is plain [M,K]x[K,N]
    b2 = b.reshape(1, d)

    in_bytes = jnp.dtype(x.dtype).itemsize
    w_bytes = jnp.dtype(W.dtype).itemsize
    b_bytes = jnp.dtype(b.dtype).itemsize
    out_bytes = jnp.dtype(out_dtype).itemsize

    # Sublane-pack-aware row alignment (8 for f32, 16 for bf16, 32 for 8-bit).
    row_align = {4: 8, 2: 16, 1: 32}.get(in_bytes, 8)
    tm_eff = min(tm, _round_up(M, row_align))
    gm = pl.cdiv(M, tm_eff)       # no host padding: partial last row tile is masked

    cost = pl.CostEstimate(
        flops=2 * M * d * d,
        transcendentals=0,
        bytes_accessed=(M * d * in_bytes + d * d * w_bytes + d * b_bytes
                        + M * d * out_bytes),
    )

    # ---- Path A: W.T fully resident in VMEM, no K-reduction grid axis ------
    resident_bytes = 2 * (tm_eff * d * in_bytes + d * d * w_bytes
                          + d * b_bytes + tm_eff * d * out_bytes)
    if not force_tiled and resident_bytes <= 24 * 1024 * 1024:
        vmem_limit = min(128 << 20, max(32 << 20, int(resident_bytes * 1.5)))
        out2 = pl.pallas_call(
            _resident_w_kernel,
            out_shape=jax.ShapeDtypeStruct((M, d), out_dtype),
            grid_spec=pltpu.PrefetchScalarGridSpec(
                num_scalar_prefetch=0,
                grid=(gm,),
                in_specs=[
                    pl.BlockSpec((tm_eff, d), lambda i: (i, 0)),
                    pl.BlockSpec((d, d), lambda i: (0, 0)),   # constant index -> single DMA
                    pl.BlockSpec((1, d), lambda i: (0, 0)),
                ],
                out_specs=pl.BlockSpec((tm_eff, d), lambda i: (i, 0)),
            ),
            compiler_params=pltpu.CompilerParams(
                dimension_semantics=("parallel",),
                vmem_limit_bytes=vmem_limit,
            ),
            cost_estimate=cost,
        )(x2, Wt, b2)
        return out2.reshape(batch, pos, d)

    # ---- Path B: tiled K reduction ------------------------------------------
    tn = _pick_feature_tile(d, tn_pref)
    tk = _pick_feature_tile(d, tk_pref)
    gn = d // tn
    gk = d // tk

    use_scratch = out_dtype != jnp.float32
    tile_bytes = 2 * (tm_eff * tk * in_bytes + tk * tn * w_bytes
                      + tn * b_bytes + tm_eff * tn * out_bytes)
    if use_scratch:
        tile_bytes += tm_eff * tn * 4
    vmem_limit = min(128 << 20, max(32 << 20, int(tile_bytes * 1.5)))

    # Put the larger independent axis first so the leading 'parallel' axis
    # splits usefully across v7x's two TensorCores; K last and 'arbitrary'.
    if gm >= gn:
        grid = (gm, gn, gk)
        x_map = lambda i, j, k: (i, k)
        w_map = lambda i, j, k: (k, j)
        b_map = lambda i, j, k: (0, j)
        o_map = lambda i, j, k: (i, j)
    else:
        grid = (gn, gm, gk)
        x_map = lambda j, i, k: (i, k)
        w_map = lambda j, i, k: (k, j)
        b_map = lambda j, i, k: (0, j)
        o_map = lambda j, i, k: (i, j)

    kernel = _tiled_kernel_acc if use_scratch else _tiled_kernel_f32out
    scratch = [pltpu.VMEM((tm_eff, tn), jnp.float32)] if use_scratch else []

    out2 = pl.pallas_call(
        kernel,
        out_shape=jax.ShapeDtypeStruct((M, d), out_dtype),
        grid_spec=pltpu.PrefetchScalarGridSpec(
            num_scalar_prefetch=0,
            grid=grid,
            in_specs=[
                pl.BlockSpec((tm_eff, tk), x_map),   # x row/K tile
                pl.BlockSpec((tk, tn), w_map),       # W.T[k-tile, n-tile]
                pl.BlockSpec((1, tn), b_map),        # bias slice
            ],
            out_specs=pl.BlockSpec((tm_eff, tn), o_map),
            scratch_shapes=scratch,
        ),
        compiler_params=pltpu.CompilerParams(
            dimension_semantics=("parallel", "parallel", "arbitrary"),
            vmem_limit_bytes=vmem_limit,
        ),
        cost_estimate=cost,
    )(x2, Wt, b2)
    return out2.reshape(batch, pos, d)


def hidden_linear_ref(x, W, b):
    # Reference: batch_addmm(b, W.T, x) == b + x @ W.T
    return b + jnp.einsum("bpd,ed->bpe", x, W)


if __name__ == "__main__":
    key = jax.random.PRNGKey(0)
    k_x, k_w, k_b = jax.random.split(key, 3)

    # Small shapes consistent with the module (batch, pos, d_model).
    batch, pos, d_model = 2, 8, 32
    x = jax.random.normal(k_x, (batch, pos, d_model), dtype=jnp.float32)
    # nn.Parameter(torch.empty(...)) is undefined-valued; use a deterministic
    # small normal draw.  Module zero-inits b, but use a nonzero deterministic b
    # here so the bias path is actually exercised.
    W = jax.random.normal(k_w, (d_model, d_model), dtype=jnp.float32) * 0.02
    b = jax.random.normal(k_b, (d_model,), dtype=jnp.float32) * 0.1

    out = jax.block_until_ready(hidden_linear(x, W, b))
    ref = hidden_linear_ref(x, W, b)
    assert out.shape == (batch, pos, d_model)
    assert jnp.allclose(out, ref, atol=1e-5, rtol=1e-5)

    # Also exercise the tiled K-reduction path (f32: accumulate into output block).
    d2 = 256
    k_x2, k_w2, k_b2 = jax.random.split(jax.random.PRNGKey(1), 3)
    x2 = jax.random.normal(k_x2, (batch, pos, d2), dtype=jnp.float32)
    W2 = jax.random.normal(k_w2, (d2, d2), dtype=jnp.float32) * 0.02
    b2 = jax.random.normal(k_b2, (d2,), dtype=jnp.float32) * 0.1
    out2 = jax.block_until_ready(hidden_linear(x2, W2, b2, force_tiled=True))
    ref2 = hidden_linear_ref(x2, W2, b2)
    assert jnp.allclose(out2, ref2, atol=1e-4, rtol=1e-4)

    # And the low-precision (f32-scratch accumulator) tiled path with bf16 operands.
    xb, Wb, bb = (x2.astype(jnp.bfloat16), W2.astype(jnp.bfloat16),
                  b2.astype(jnp.bfloat16))
    out3 = jax.block_until_ready(hidden_linear(xb, Wb, bb, force_tiled=True))
    ref3 = hidden_linear_ref(xb.astype(jnp.float32), Wb.astype(jnp.float32),
                             bb.astype(jnp.float32))
    assert jnp.allclose(out3.astype(jnp.float32), ref3, atol=2e-2, rtol=2e-2)

    print("KERNEL_OK")
</pallas_src>

<mosaic_0001>
module attributes {stable_mosaic.version = 11 : i64} {
  func.func @_resident_w_kernel(%arg0: i32, %arg1: memref<16x32xf32, #tpu.memory_space<vmem>>, %arg2: memref<32x32xf32, #tpu.memory_space<vmem>>, %arg3: memref<1x32xf32, #tpu.memory_space<vmem>>, %arg4: memref<16x32xf32, #tpu.memory_space<vmem>>) attributes {dimension_semantics = [#tpu.dimension_semantics<parallel>], iteration_bounds = array<i64: 1>, scalar_prefetch = 0 : i64, scratch_operands = 0 : i64, tpu.core_type = #tpu.core_type<tc>, window_params = [{transform_indices = @transform_0, window_bounds = array<i64: 16, 32>}, {pipeline_mode = #tpu.pipeline_mode<synchronous>, transform_indices = @transform_1, window_bounds = array<i64: 32, 32>}, {pipeline_mode = #tpu.pipeline_mode<synchronous>, transform_indices = @transform_2, window_bounds = array<i64: 1, 32>}, {transform_indices = @transform_3, window_bounds = array<i64: 16, 32>}]} {
    %c0 = arith.constant 0 : index
    %c0_0 = arith.constant 0 : index
    %0 = vector.load %arg1[%c0, %c0_0] : memref<16x32xf32, #tpu.memory_space<vmem>>, vector<16x32xf32>
    %c0_1 = arith.constant 0 : index
    %c0_2 = arith.constant 0 : index
    %1 = vector.load %arg2[%c0_1, %c0_2] : memref<32x32xf32, #tpu.memory_space<vmem>>, vector<32x32xf32>
    %cst = arith.constant dense<0.000000e+00> : vector<16x32xf32>
    %2 = tpu.matmul %0, %1, %cst {dimension_numbers = #tpu.dot_dimension_numbers<[1], [0], [0], [1], [0, 0, 1, 1], [], []>} : vector<16x32xf32>, vector<32x32xf32>, vector<16x32xf32> -> vector<16x32xf32>
    %c0_3 = arith.constant 0 : index
    %c0_4 = arith.constant 0 : index
    %3 = vector.load %arg3[%c0_3, %c0_4] : memref<1x32xf32, #tpu.memory_space<vmem>>, vector<1x32xf32>
    %4 = vector.broadcast %3 : vector<1x32xf32> to vector<16x32xf32>
    %5 = arith.addf %2, %4 : vector<16x32xf32>
    %c0_5 = arith.constant 0 : index
    %c0_6 = arith.constant 0 : index
    %6 = vector.load %arg4[%c0_5, %c0_6] : memref<16x32xf32, #tpu.memory_space<vmem>>, vector<16x32xf32>
    tpu.vector_store %arg4[%c0_5, %c0_6], %5 {strides = array<i32>} : memref<16x32xf32, #tpu.memory_space<vmem>>, vector<16x32xf32>,
    return
  }
  func.func @transform_0(%arg0: i32) -> (i32, i32) {
    %c0_i32 = arith.constant 0 : i32
    %c0_i32_0 = arith.constant 0 : i32
    return %arg0, %c0_i32 : i32, i32
  }
  func.func @transform_1(%arg0: i32) -> (i32, i32) {
    %c0_i32 = arith.constant 0 : i32
    %c0_i32_0 = arith.constant 0 : i32
    %c0_i32_1 = arith.constant 0 : i32
    return %c0_i32, %c0_i32_0 : i32, i32
  }
  func.func @transform_2(%arg0: i32) -> (i32, i32) {
    %c0_i32 = arith.constant 0 : i32
    %c0_i32_0 = arith.constant 0 : i32
    %c0_i32_1 = arith.constant 0 : i32
    return %c0_i32, %c0_i32_0 : i32, i32
  }
  func.func @transform_3(%arg0: i32) -> (i32, i32) {
    %c0_i32 = arith.constant 0 : i32
    %c0_i32_0 = arith.constant 0 : i32
    return %arg0, %c0_i32 : i32, i32
  }
}

</mosaic_0001>

<llo_original>
// kernel: tpu_custom_call.1
$region0: #{tpu_custom_call.1}
  #allocation0 [shape = 'u32[]', space=smem, size = 0x4, offset = 0x4, fixed_abs, tag = 'smem constant byte address 0x4 - core index']
  #allocation1 [shape = 'u32[144,128]{1,0:T(1,128)}', space=vmem, size = 0x12000, scoped, tag = 'internal scratch']
  %s0 = inlined_call_operand.hbm [shape: f32[16,32], index: 0, kind: input, shape index: {}]
  %s1 = inlined_call_operand.hbm [shape: f32[32,32], index: 1, kind: input, shape index: {}]
  %s2 = inlined_call_operand.vmem [shape: f32[1,32], index: 2, kind: input, shape index: {}]
  %s3 = inlined_call_operand.hbm [shape: f32[16,32], index: 3, kind: output, shape index: {}]
  %s4 = sld [smem:[#allocation0]]
  $region30: #{tpu_custom_call.1} parent=0
    _
  %s6 = ssub.s32 1, %s4
  %s7 = scalar_select 0, %s6, %s4
  $region1: #{tpu_custom_call.1} parent=0
    #allocation2 [shape = 'u8[8192]{0}', space=vmem, size = 0x2000, scoped, tag = 'input window, operand 0, single buffered']
    #allocation3 [shape = 's32[1]{0}', space=sflag, size = 0x4, scoped, tag = 'scoped memory for tpu_custom_call.1']
    #allocation4 [shape = 's32[1]{0}', space=sflag, size = 0x4, scoped, tag = 'scoped memory for tpu_custom_call.1']
    #allocation5 [shape = 'u8[16384]{0}', space=vmem, size = 0x4000, scoped, tag = 'input window, operand 1, single buffered']
    #allocation6 [shape = 's32[1]{0}', space=sflag, size = 0x4, scoped, tag = 'scoped memory for tpu_custom_call.1']
    #allocation7 [shape = 'u8[8192]{0}', space=vmem, size = 0x2000, scoped, tag = 'output window, operand 0, single buffered']
    %8 = vsyncpa [#allocation3], 0
    %9 = vsyncpa [#allocation6], 0
    %10 = vsyncpa [#allocation4], 0
    // Predicated region
    $region2: #{tpu_custom_call.1} parent=1 // pred_check
      _
    $region3: #{tpu_custom_call.1} parent=1 // pred_check_branch
      %12 = sbr.rel (0) target = $region5
    $region4: #{tpu_custom_call.1} parent=1 // pred_region
      %s14 = ssub.s32 256, 256
      %15 = vsyncadd [#allocation3], %s14
      %s16 = sshll.u32 [#allocation2], 4
      %s17 = int_to_ptr.vmem [resolvable:$true] %s16
      %22 = dma.hbm_to_vmem [thread:$0]  %s0, 256, %s17, [#allocation3], 128, 128, 8
    $region5: #{tpu_custom_call.1} parent=1 // pred_fallthru
      _
    // Predicated region
    $region6: #{tpu_custom_call.1} parent=1 // pred_check
      _
    $region7: #{tpu_custom_call.1} parent=1 // pred_check_branch
      %24 = sbr.rel (0) target = $region9
    $region8: #{tpu_custom_call.1} parent=1 // pred_region
      %s26 = ssub.s32 512, 512
      %27 = vsyncadd [#allocation6], %s26
      %s28 = sshll.u32 [#allocation5], 4
      %s29 = int_to_ptr.vmem [resolvable:$true] %s28
      %34 = dma.hbm_to_vmem [thread:$0]  %s1, 512, %s29, [#allocation6], 128, 128, 8
    $region9: #{tpu_custom_call.1} parent=1 // pred_fallthru
      _
    // Predicated region
    $region10: #{tpu_custom_call.1} parent=1 // pred_check
      _
    $region11: #{tpu_custom_call.1} parent=1 // pred_check_branch
      %36 = sbr.rel (0) target = $region13
    $region12: #{tpu_custom_call.1} parent=1 // pred_region
      _
    $region13: #{tpu_custom_call.1} parent=1 // pred_fallthru
      _
    // Predicated region
    $region14: #{tpu_custom_call.1} parent=1 // pred_check
      _
    $region15: #{tpu_custom_call.1} parent=1 // pred_check_branch
      %38 = sbr.rel (0) target = $region17
    $region16: #{tpu_custom_call.1} parent=1 // pred_region
      %39 = dma.done [#allocation3], 256
    $region17: #{tpu_custom_call.1} parent=1 // pred_fallthru
      _
    // Predicated region
    $region18: #{tpu_custom_call.1} parent=1 // pred_check
      _
    $region19: #{tpu_custom_call.1} parent=1 // pred_check_branch
      %41 = sbr.rel (0) target = $region21
    $region20: #{tpu_custom_call.1} parent=1 // pred_region
      %42 = dma.done [#allocation6], 512
    $region21: #{tpu_custom_call.1} parent=1 // pred_fallthru
      _
    %v43 = vld [vmem:[#allocation2] sm:$0xff]
    %v44 = vld [vmem:[#allocation2 + $0x8] sm:$0xff]
    %v45 = vld [vmem:[#allocation5] sm:$0xff]
    %v46 = vld [vmem:[#allocation5 + $0x8] sm:$0xff]
    %v47 = vld [vmem:[#allocation5 + $0x10] sm:$0xff]
    %v48 = vld [vmem:[#allocation5 + $0x18] sm:$0xff]
    %v49 = vld [vmem:[%s2] sm:$0x1]
    %v51 = vlaneseq
    %v52 = vshrl.u32 %v51, 7
    %v53 = vsub.s32 0, %v52
    %v54 = vrot.slane %v49, %v53
    %vm56 = vcmask 261120
    %v58 = vsel %vm56, %v43, 0
    %v61 = vsel %vm56, %v44, 0
    %63 = vmatprep.subr.mxu0 0.0
    %64 = vmatpush1.msra.mxu0 %v45
    %65 = vmatprep.subr.mxu0 0.0
    %66 = vmatpush1.msra.mxu0 %v46
    %67 = vmatprep.subr.mxu0 0.0
    %68 = vmatpush1.msra.mxu0 %v47
    %69 = vmatprep.subr.mxu0 0.0
    %70 = vmatpush1.msra.mxu0 %v48
    %71 = vmatprep.subr.mxu0 0.0
    %72 = vmatpush1.msra.mxu0 0.0
    %73 = vmatprep.subr.mxu0 0.0
    %74 = vmatpush1.msra.mxu0 0.0
    %75 = vmatprep.subr.mxu0 0.0
    %76 = vmatpush1.msra.mxu0 0.0
    %77 = vmatprep.subr.mxu0 0.0
    %78 = vmatpush1.msra.mxu0 0.0
    %79 = vmatprep.subr.mxu0 0.0
    %80 = vmatpush1.msra.mxu0 0.0
    %81 = vmatprep.subr.mxu0 0.0
    %82 = vmatpush1.msra.mxu0 0.0
    %83 = vmatprep.subr.mxu0 0.0
    %84 = vmatpush1.msra.mxu0 0.0
    %85 = vmatprep.subr.mxu0 0.0
    %86 = vmatpush1.msra.mxu0 0.0
    %87 = vmatprep.subr.mxu0 0.0
    %88 = vmatpush1.msra.mxu0 0.0
    %89 = vmatprep.subr.mxu0 0.0
    %90 = vmatpush1.msra.mxu0 0.0
    %91 = vmatprep.subr.mxu0 0.0
    %92 = vmatpush1.msra.mxu0 0.0
    %93 = vmatprep.subr.mxu0 0.0
    %94 = vmatpush1.msra.mxu0 0.0
    %95 = vmatprep.subr.mxu0 0.0
    %96 = vmatpush1.msra.mxu0 0.0
    %97 = vmatprep.subr.mxu0 0.0
    %98 = vmatpush1.msra.mxu0 0.0
    %99 = vmatprep.subr.mxu0 0.0
    %100 = vmatpush1.msra.mxu0 0.0
    %101 = vmatprep.subr.mxu0 0.0
    %102 = vmatpush1.msra.mxu0 0.0
    %103 = vmatprep.subr.mxu0 0.0
    %104 = vmatpush1.msra.mxu0 0.0
    %105 = vmatprep.subr.mxu0 0.0
    %106 = vmatpush1.msra.mxu0 0.0
    %107 = vmatprep.subr.mxu0 0.0
    %108 = vmatpush1.msra.mxu0 0.0
    %109 = vmatprep.subr.mxu0 0.0
    %110 = vmatpush1.msra.mxu0 0.0
    %111 = vmatprep.subr.mxu0 0.0
    %112 = vmatpush1.msra.mxu0 0.0
    %113 = vmatprep.subr.mxu0 0.0
    %114 = vmatpush1.msra.mxu0 0.0
    %115 = vmatprep.subr.mxu0 0.0
    %116 = vmatpush1.msra.mxu0 0.0
    %117 = vmatprep.subr.mxu0 0.0
    %118 = vmatpush1.msra.mxu0 0.0
    %119 = vmatprep.subr.mxu0 0.0
    %120 = vmatpush1.msra.mxu0 0.0
    %121 = vmatprep.subr.mxu0 0.0
    %122 = vmatpush1.msra.mxu0 0.0
    %123 = vmatprep.subr.mxu0 0.0
    %124 = vmatpush1.msra.mxu0 0.0
    %125 = vmatprep.subr.mxu0 0.0
    %126 = vmatpush1.msra.mxu0 0.0
    %127 = vmatprep.mubr.f32.mxu0 0.0
    %128 = vmatmul.mubr.f32.gmra.mrb[0].mxu0 %v58
    %v129 = vpop.f32.mrb[0].mxu0
    %v130 = vadd.f32 %v54, %v129
    %v131 = vpop.f32.mrb[0].mxu0
    %132 = vmatprep.mubr.f32.mxu0 0.0
    %133 = vmatmul.mubr.f32.gmra.mrb[0].mxu0 %v61
    %v134 = vpop.f32.mrb[0].mxu0
    %v135 = vadd.f32 %v54, %v134
    %v136 = vpop.f32.mrb[0].mxu0
    %137 = vdwg.mxu0
    %138 = vst.msk [vmem:[#allocation7] sm:$0xff] %vm56, %v130
    %139 = vst.msk [vmem:[#allocation7 + $0x8] sm:$0xff] %vm56, %v135
    // Predicated region
    $region22: #{tpu_custom_call.1} parent=1 // pred_check
      _
    $region23: #{tpu_custom_call.1} parent=1 // pred_check_branch
      %141 = sbr.rel (0) target = $region25
    $region24: #{tpu_custom_call.1} parent=1 // pred_region
      %s143 = ssub.s32 256, 256
      %144 = vsyncadd [#allocation4], %s143
      %s145 = sshll.u32 [#allocation7], 4
      %s146 = int_to_ptr.vmem [resolvable:$true] %s145
      %151 = dma.vmem_to_hbm [thread:$0]  %s146, 256, %s3, [#allocation4], 128, 128, 8
    $region25: #{tpu_custom_call.1} parent=1 // pred_fallthru
      _
    // Predicated region
    $region26: #{tpu_custom_call.1} parent=1 // pred_check
      _
    $region27: #{tpu_custom_call.1} parent=1 // pred_check_branch
      %153 = sbr.rel (0) target = $region29
    $region28: #{tpu_custom_call.1} parent=1 // pred_region
      %154 = dma.done [#allocation4], 256
    $region29: #{tpu_custom_call.1} parent=1 // pred_fallthru
      _
    %155 = vsyncpa [#allocation3], 1
    %156 = vsyncpa [#allocation6], 1
    %157 = vsyncpa [#allocation4], 1

</llo_original>
